<compile_context>
chip_gen: v6e
topology: v6e:2x2x1
jax: 0.10.0
libtpu: 0.0.40
codegen_flags: <defaults>
</compile_context>

<pallas_src>
import functools
import math

import jax
import jax.numpy as jnp
from jax.experimental import pallas as pl
from jax.experimental.pallas import tpu as pltpu

_INV_SQRT2 = 1.0 / math.sqrt(2.0)
_LN_EPS = 1e-12
_P_HIGH = jax.lax.Precision.HIGHEST


# ---------------------------------------------------------------------------
# Tiling / compiler-param helpers
# ---------------------------------------------------------------------------
def _pick_tile(dim, target, align):
    """Largest tile <= target that is a multiple of `align` AND divides `dim`.

    Falls back to the full dimension (always a legal block shape)."""
    if dim <= target:
        return dim
    t = (target // align) * align
    while t >= align:
        if dim % t == 0:
            return t
        t -= align
    return dim


def _pad_rows(x2, mult=8):
    """Pad the row dim of a 2-D array to a multiple of `mult`."""
    m = x2.shape[0]
    pad = (-m) % mult
    if pad:
        x2 = jnp.pad(x2, ((0, pad), (0, 0)))
    return x2, m


_VMEM_CAP_BYTES = None


def _vmem_capacity_bytes():
    """Physical per-core VMEM (64 MiB on v7x, 128 MiB on v5e/v6e)."""
    global _VMEM_CAP_BYTES
    if _VMEM_CAP_BYTES is None:
        try:
            _VMEM_CAP_BYTES = int(pltpu.get_tpu_info().vmem_capacity_bytes)
        except Exception:  # pragma: no cover - conservative fallback (v7x)
            _VMEM_CAP_BYTES = 64 << 20
    return _VMEM_CAP_BYTES


def _compiler_params(semantics, est_vmem_bytes=0):
    kwargs = dict(dimension_semantics=semantics)
    # v5e's default scoped VMEM is only 16 MiB -> raise the limit early, but
    # never above 3/4 of the physical VMEM of the current generation.
    if est_vmem_bytes > (12 << 20):
        cap = (_vmem_capacity_bytes() * 3) // 4
        kwargs["vmem_limit_bytes"] = int(min(max(est_vmem_bytes * 2, 16 << 20), cap))
    return pltpu.CompilerParams(**kwargs)


# ---------------------------------------------------------------------------
# Kernel bodies
# ---------------------------------------------------------------------------
def _linear_kernel(x_ref, w_ref, b_ref, o_ref, acc_ref, *, activation):
    """o = act(x @ w + b); bf16 MXU matmul accumulated in f32 over the K axis."""

    @pl.when(pl.program_id(2) == 0)
    def _():
        acc_ref[...] = jnp.zeros_like(acc_ref)

    acc_ref[...] += jnp.dot(
        x_ref[...].astype(jnp.bfloat16),
        w_ref[...].astype(jnp.bfloat16),
        preferred_element_type=jnp.float32,
    )

    @pl.when(pl.program_id(2) == pl.num_programs(2) - 1)
    def _():
        y = acc_ref[...] + b_ref[...].astype(jnp.float32)
        if activation == "gelu":
            # exact erf-based GELU fused into the matmul epilogue
            y = y * 0.5 * (1.0 + jax.lax.erf(y * _INV_SQRT2))
        o_ref[...] = y.astype(o_ref.dtype)


def _linear_res_ln_kernel(x_ref, w_ref, b_ref, r_ref, g_ref, be_ref, o_ref,
                          acc_ref, *, eps):
    """o = LayerNorm(x @ w + b + residual); N == full row so LN fuses here."""

    @pl.when(pl.program_id(1) == 0)
    def _():
        acc_ref[...] = jnp.zeros_like(acc_ref)

    acc_ref[...] += jnp.dot(
        x_ref[...].astype(jnp.bfloat16),
        w_ref[...].astype(jnp.bfloat16),
        preferred_element_type=jnp.float32,
    )

    @pl.when(pl.program_id(1) == pl.num_programs(1) - 1)
    def _():
        y = (acc_ref[...] + b_ref[...].astype(jnp.float32)
             + r_ref[...].astype(jnp.float32))
        mean = jnp.mean(y, axis=-1, keepdims=True)
        cent = y - mean
        var = jnp.mean(cent * cent, axis=-1, keepdims=True)
        o_ref[...] = (
            cent * jax.lax.rsqrt(var + eps) * g_ref[...].astype(jnp.float32)
            + be_ref[...].astype(jnp.float32)
        ).astype(o_ref.dtype)


def _layernorm_kernel(x_ref, g_ref, b_ref, o_ref, *, eps):
    x = x_ref[...].astype(jnp.float32)
    mean = jnp.mean(x, axis=-1, keepdims=True)
    cent = x - mean
    var = jnp.mean(cent * cent, axis=-1, keepdims=True)
    y = cent * jax.lax.rsqrt(var + eps)
    o_ref[...] = (
        y * g_ref[...].astype(jnp.float32) + b_ref[...].astype(jnp.float32)
    ).astype(o_ref.dtype)


def _dual_ln_avg_kernel(xa_ref, xb_ref, ga_ref, ba_ref, gb_ref, bb_ref, o_ref, *, eps):
    def _ln(x, g, b):
        mean = jnp.mean(x, axis=-1, keepdims=True)
        cent = x - mean
        var = jnp.mean(cent * cent, axis=-1, keepdims=True)
        return cent * jax.lax.rsqrt(var + eps) * g + b

    a = _ln(xa_ref[...].astype(jnp.float32),
            ga_ref[...].astype(jnp.float32),
            ba_ref[...].astype(jnp.float32))
    bb = _ln(xb_ref[...].astype(jnp.float32),
             gb_ref[...].astype(jnp.float32),
             bb_ref[...].astype(jnp.float32))
    o_ref[...] = ((a + bb) * 0.5).astype(o_ref.dtype)


def _attention_kernel(*refs, scale, num_heads, head_dim, hidden, has_mask,
                      self_attn):
    """Per-batch, all-heads softmax(QK^T*scale + mask)V with lane-dense (S,H) IO."""
    if self_attn:
        if has_mask:
            qkv_ref, m_ref, o_ref = refs
        else:
            qkv_ref, o_ref = refs
            m_ref = None
        qkv = qkv_ref[0].astype(jnp.bfloat16)               # (S, 3H)
        q = qkv[:, :hidden]
        k = qkv[:, hidden:2 * hidden]
        v = qkv[:, 2 * hidden:]
    else:
        if has_mask:
            q_ref, kv_ref, m_ref, o_ref = refs
        else:
            q_ref, kv_ref, o_ref = refs
            m_ref = None
        q = q_ref[0].astype(jnp.bfloat16)                   # (Sq, H)
        kv = kv_ref[0].astype(jnp.bfloat16)                 # (Sk, 2H)
        k = kv[:, :hidden]
        v = kv[:, hidden:]

    if has_mask:
        mask = m_ref[0].astype(jnp.float32)                 # (1, Sk) additive

    outs = []
    for h in range(num_heads):                              # unrolled over heads
        lo = h * head_dim
        hi = lo + head_dim
        # TODO(synk): feed K pre-transposed / flash-tile for long sequences.
        s = jax.lax.dot_general(
            q[:, lo:hi], k[:, lo:hi], (((1,), (1,)), ((), ())),
            preferred_element_type=jnp.float32,
        ) * scale
        if has_mask:
            s = s + mask
        s = s - jnp.max(s, axis=-1, keepdims=True)
        p = jnp.exp(s)
        p = p * pl.reciprocal(jnp.sum(p, axis=-1, keepdims=True), approx=True)
        outs.append(jnp.dot(p.astype(jnp.bfloat16), v[:, lo:hi],
                            preferred_element_type=jnp.float32))
    # single lane-dense (Sq, H) store
    o_ref[0] = jnp.concatenate(outs, axis=-1).astype(o_ref.dtype)


# ---------------------------------------------------------------------------
# Pallas wrappers
# ---------------------------------------------------------------------------
def linear(x, w, b, activation=None):
    """y = activation(x @ w + b) ; x: (..., K), w: (K, N) [bf16 ok], b: (N,)."""
    orig_shape = x.shape
    K = orig_shape[-1]
    N = w.shape[1]
    x2 = x.reshape(-1, K)
    x2, m_orig = _pad_rows(x2)
    Mp = x2.shape[0]
    b2 = b.reshape(1, N)

    tm = _pick_tile(Mp, 512, 8)
    tn = _pick_tile(N, 512, 128)
    tk = _pick_tile(K, 512, 128)
    grid = (Mp // tm, N // tn, K // tk)

    est = 4 * (tm * tk + tk * tn + tn) + 4 * 2 * tm * tn

    out = pl.pallas_call(
        functools.partial(_linear_kernel, activation=activation),
        out_shape=jax.ShapeDtypeStruct((Mp, N), x.dtype),
        grid=grid,
        in_specs=[
            pl.BlockSpec((tm, tk), lambda i, j, k: (i, k)),
            pl.BlockSpec((tk, tn), lambda i, j, k: (k, j)),
            pl.BlockSpec((1, tn), lambda i, j, k: (0, j)),
        ],
        out_specs=pl.BlockSpec((tm, tn), lambda i, j, k: (i, j)),
        scratch_shapes=[pltpu.VMEM((tm, tn), jnp.float32)],
        compiler_params=_compiler_params(("parallel", "parallel", "arbitrary"), est),
    )(x2, w, b2)
    if Mp != m_orig:
        out = out[:m_orig]
    return out.reshape(orig_shape[:-1] + (N,))


def linear_residual_ln(x, w, b, residual, gamma, beta, eps=_LN_EPS):
    """LayerNorm(x @ w + b + residual) — BertSelfOutput / BertOutput fusion."""
    orig_shape = residual.shape
    K = x.shape[-1]
    N = w.shape[1]
    x2 = x.reshape(-1, K)
    r2 = residual.reshape(-1, N)
    x2, m_orig = _pad_rows(x2)
    r2, _ = _pad_rows(r2)
    Mp = x2.shape[0]

    tm = _pick_tile(Mp, 512, 8)
    tk = _pick_tile(K, 512, 128)
    grid = (Mp // tm, K // tk)

    est = 4 * (tm * tk + tk * N + 3 * N + tm * N) + 4 * 2 * tm * N

    out = pl.pallas_call(
        functools.partial(_linear_res_ln_kernel, eps=eps),
        out_shape=jax.ShapeDtypeStruct((Mp, N), residual.dtype),
        grid=grid,
        in_specs=[
            pl.BlockSpec((tm, tk), lambda i, k: (i, k)),
            pl.BlockSpec((tk, N), lambda i, k: (k, 0)),
            pl.BlockSpec((1, N), lambda i, k: (0, 0)),
            pl.BlockSpec((tm, N), lambda i, k: (i, 0)),
            pl.BlockSpec((1, N), lambda i, k: (0, 0)),
            pl.BlockSpec((1, N), lambda i, k: (0, 0)),
        ],
        out_specs=pl.BlockSpec((tm, N), lambda i, k: (i, 0)),
        scratch_shapes=[pltpu.VMEM((tm, N), jnp.float32)],
        compiler_params=_compiler_params(("parallel", "arbitrary"), est),
    )(x2, w, b.reshape(1, N), r2, gamma.reshape(1, N), beta.reshape(1, N))
    if Mp != m_orig:
        out = out[:m_orig]
    return out.reshape(orig_shape)


def layernorm(x, gamma, beta, eps=_LN_EPS):
    orig_shape = x.shape
    H = orig_shape[-1]
    x2 = x.reshape(-1, H)
    x2, m_orig = _pad_rows(x2)
    Mp = x2.shape[0]
    tm = _pick_tile(Mp, 512, 8)

    out = pl.pallas_call(
        functools.partial(_layernorm_kernel, eps=eps),
        out_shape=jax.ShapeDtypeStruct((Mp, H), x.dtype),
        grid=(Mp // tm,),
        in_specs=[
            pl.BlockSpec((tm, H), lambda i: (i, 0)),
            pl.BlockSpec((1, H), lambda i: (0, 0)),
            pl.BlockSpec((1, H), lambda i: (0, 0)),
        ],
        out_specs=pl.BlockSpec((tm, H), lambda i: (i, 0)),
        compiler_params=_compiler_params(("parallel",)),
    )(x2, gamma.reshape(1, H), beta.reshape(1, H))
    if Mp != m_orig:
        out = out[:m_orig]
    return out.reshape(orig_shape)


def dual_layernorm_avg(xa, xb, ga, ba, gb, bb, eps=_LN_EPS):
    """(LN_a(xa) + LN_b(xb)) / 2 — VisualFeatEncoder fusion."""
    orig_shape = xa.shape
    H = orig_shape[-1]
    a2 = xa.reshape(-1, H)
    b2 = xb.reshape(-1, H)
    a2, m_orig = _pad_rows(a2)
    b2, _ = _pad_rows(b2)
    Mp = a2.shape[0]
    tm = _pick_tile(Mp, 512, 8)

    out = pl.pallas_call(
        functools.partial(_dual_ln_avg_kernel, eps=eps),
        out_shape=jax.ShapeDtypeStruct((Mp, H), xa.dtype),
        grid=(Mp // tm,),
        in_specs=[
            pl.BlockSpec((tm, H), lambda i: (i, 0)),
            pl.BlockSpec((tm, H), lambda i: (i, 0)),
            pl.BlockSpec((1, H), lambda i: (0, 0)),
            pl.BlockSpec((1, H), lambda i: (0, 0)),
            pl.BlockSpec((1, H), lambda i: (0, 0)),
            pl.BlockSpec((1, H), lambda i: (0, 0)),
        ],
        out_specs=pl.BlockSpec((tm, H), lambda i: (i, 0)),
        compiler_params=_compiler_params(("parallel",)),
    )(a2, b2, ga.reshape(1, H), ba.reshape(1, H), gb.reshape(1, H), bb.reshape(1, H))
    if Mp != m_orig:
        out = out[:m_orig]
    return out.reshape(orig_shape)


def attention_core(q_src, kv_src, mask, num_heads, head_dim, hidden, scale,
                   self_attn):
    """softmax(q k^T * scale + mask) v for all heads of one batch per grid step.

    self_attn=True : q_src is the packed (B, S, 3H) QKV projection.
    self_attn=False: q_src is (B, Sq, H), kv_src is the packed (B, Sk, 2H) KV.
    """
    B, Sq = q_src.shape[0], q_src.shape[1]
    Sk = Sq if self_attn else kv_src.shape[1]
    has_mask = mask is not None

    args = [q_src]
    in_specs = [pl.BlockSpec((1, Sq, q_src.shape[2]), lambda b: (b, 0, 0))]
    if not self_attn:
        args.append(kv_src)
        in_specs.append(pl.BlockSpec((1, Sk, kv_src.shape[2]), lambda b: (b, 0, 0)))
    if has_mask:
        args.append(mask.reshape(B, 1, Sk).astype(jnp.float32))
        in_specs.append(pl.BlockSpec((1, 1, Sk), lambda b: (b, 0, 0)))

    out = pl.pallas_call(
        functools.partial(_attention_kernel, scale=scale, num_heads=num_heads,
                          head_dim=head_dim, hidden=hidden, has_mask=has_mask,
                          self_attn=self_attn),
        out_shape=jax.ShapeDtypeStruct((B, Sq, hidden), q_src.dtype),
        grid=(B,),
        in_specs=in_specs,
        out_specs=pl.BlockSpec((1, Sq, hidden), lambda b: (b, 0, 0)),
        compiler_params=_compiler_params(("parallel",)),
    )(*args)
    return out


# ---------------------------------------------------------------------------
# Parameter init (f32, used by the pure-JAX reference)
# ---------------------------------------------------------------------------
def _dense_params(key, in_dim, out_dim, scale=0.02):
    kw, kb = jax.random.split(key)
    return {
        "w": jax.random.normal(kw, (in_dim, out_dim), jnp.float32) * scale,
        "b": jax.random.normal(kb, (out_dim,), jnp.float32) * scale,
    }


def _ln_params(dim):
    return {"g": jnp.ones((dim,), jnp.float32), "b": jnp.zeros((dim,), jnp.float32)}


def init_attention(key, H):
    ks = jax.random.split(key, 4)
    return {
        "q": _dense_params(ks[0], H, H),
        "k": _dense_params(ks[1], H, H),
        "v": _dense_params(ks[2], H, H),
        "out": _dense_params(ks[3], H, H),
        "out_ln": _ln_params(H),
    }


def init_ffn(key, H, I):
    ks = jax.random.split(key, 2)
    return {
        "inter": _dense_params(ks[0], H, I),
        "out": _dense_params(ks[1], I, H),
        "out_ln": _ln_params(H),
    }


def init_bert_layer(key, H, I):
    k1, k2 = jax.random.split(key)
    return {"att": init_attention(k1, H), "ffn": init_ffn(k2, H, I)}


def init_x_layer(key, H, I):
    ks = jax.random.split(key, 5)
    return {
        "visual_attention": init_attention(ks[0], H),
        "lang_self_att": init_attention(ks[1], H),
        "visn_self_att": init_attention(ks[2], H),
        "lang_ffn": init_ffn(ks[3], H, I),
        "visn_ffn": init_ffn(ks[4], H, I),
    }


def init_visual_feat_encoder(key, feat_dim, pos_dim, H):
    k1, k2 = jax.random.split(key)
    return {
        "visn_fc": _dense_params(k1, feat_dim, H),
        "visn_ln": _ln_params(H),
        "box_fc": _dense_params(k2, pos_dim, H),
        "box_ln": _ln_params(H),
    }


def init_encoder(key, cfg):
    H, I = cfg["hidden_size"], cfg["intermediate_size"]
    n_l, n_x, n_r = cfg["l_layers"], cfg["x_layers"], cfg["r_layers"]
    keys = jax.random.split(key, 1 + n_l + n_r + n_x)
    params = {
        "visn_fc": init_visual_feat_encoder(
            keys[0], cfg["visual_feat_dim"], cfg["visual_pos_dim"], H
        )
    }
    idx = 1
    params["layer"] = [init_bert_layer(keys[idx + i], H, I) for i in range(n_l)]
    idx += n_l
    params["r_layers"] = [init_bert_layer(keys[idx + i], H, I) for i in range(n_r)]
    idx += n_r
    params["x_layers"] = [init_x_layer(keys[idx + i], H, I) for i in range(n_x)]
    return params


# ---------------------------------------------------------------------------
# Pallas-side parameter preparation (bf16 weights, fused QKV / KV)
# ---------------------------------------------------------------------------
def _prep_attention(p):
    bf = jnp.bfloat16
    return {
        "q_w": p["q"]["w"].astype(bf),
        "q_b": p["q"]["b"],
        "qkv_w": jnp.concatenate(
            [p["q"]["w"], p["k"]["w"], p["v"]["w"]], axis=1).astype(bf),
        "qkv_b": jnp.concatenate([p["q"]["b"], p["k"]["b"], p["v"]["b"]], axis=0),
        "kv_w": jnp.concatenate([p["k"]["w"], p["v"]["w"]], axis=1).astype(bf),
        "kv_b": jnp.concatenate([p["k"]["b"], p["v"]["b"]], axis=0),
        "out_w": p["out"]["w"].astype(bf),
        "out_b": p["out"]["b"],
        "ln_g": p["out_ln"]["g"],
        "ln_b": p["out_ln"]["b"],
    }


def _prep_ffn(p):
    bf = jnp.bfloat16
    return {
        "inter_w": p["inter"]["w"].astype(bf),
        "inter_b": p["inter"]["b"],
        "out_w": p["out"]["w"].astype(bf),
        "out_b": p["out"]["b"],
        "ln_g": p["out_ln"]["g"],
        "ln_b": p["out_ln"]["b"],
    }


def _prep_bert_layer(p):
    return {"att": _prep_attention(p["att"]), "ffn": _prep_ffn(p["ffn"])}


def _prep_x_layer(p):
    return {
        "visual_attention": _prep_attention(p["visual_attention"]),
        "lang_self_att": _prep_attention(p["lang_self_att"]),
        "visn_self_att": _prep_attention(p["visn_self_att"]),
        "lang_ffn": _prep_ffn(p["lang_ffn"]),
        "visn_ffn": _prep_ffn(p["visn_ffn"]),
    }


def _prep_visn_fc(p):
    bf = jnp.bfloat16
    return {
        "visn_w": p["visn_fc"]["w"].astype(bf), "visn_b": p["visn_fc"]["b"],
        "visn_ln_g": p["visn_ln"]["g"], "visn_ln_b": p["visn_ln"]["b"],
        "box_w": p["box_fc"]["w"].astype(bf), "box_b": p["box_fc"]["b"],
        "box_ln_g": p["box_ln"]["g"], "box_ln_b": p["box_ln"]["b"],
    }


def prepare_pallas_params(params):
    return {
        "visn_fc": _prep_visn_fc(params["visn_fc"]),
        "layer": [_prep_bert_layer(p) for p in params["layer"]],
        "r_layers": [_prep_bert_layer(p) for p in params["r_layers"]],
        "x_layers": [_prep_x_layer(p) for p in params["x_layers"]],
    }


# ---------------------------------------------------------------------------
# Pallas-backed forward pass (mirrors the PyTorch module structure)
# ---------------------------------------------------------------------------
def attention_forward(p, hidden, ctx, mask, num_heads, self_attn):
    """BertSelfAttention (+ fused QKV/KV projections) + BertSelfOutput."""
    H = hidden.shape[-1]
    Dh = H // num_heads
    scale = 1.0 / math.sqrt(Dh)

    if self_attn:
        qkv = linear(hidden, p["qkv_w"], p["qkv_b"])          # (B, S, 3H)
        ctx_out = attention_core(qkv, None, mask, num_heads, Dh, H, scale, True)
    else:
        q = linear(hidden, p["q_w"], p["q_b"])                # (B, Sq, H)
        kv = linear(ctx, p["kv_w"], p["kv_b"])                # (B, Sk, 2H)
        ctx_out = attention_core(q, kv, mask, num_heads, Dh, H, scale, False)

    # dropout: identity (eval); residual + LN fused in the out-proj epilogue
    return linear_residual_ln(ctx_out, p["out_w"], p["out_b"], hidden,
                              p["ln_g"], p["ln_b"])


def ffn_forward(p, x):
    """BertIntermediate (GELU fused) + BertOutput (residual + LN fused)."""
    inter = linear(x, p["inter_w"], p["inter_b"], activation="gelu")
    return linear_residual_ln(inter, p["out_w"], p["out_b"], x, p["ln_g"], p["ln_b"])


def bert_layer_forward(p, x, mask, num_heads):
    att = attention_forward(p["att"], x, x, mask, num_heads, self_attn=True)
    return ffn_forward(p["ffn"], att)


def x_layer_forward(p, lang, lang_mask, visn, visn_mask, num_heads):
    # cross attention (shared weights for both directions)
    lang_att = attention_forward(p["visual_attention"], lang, visn, visn_mask,
                                 num_heads, self_attn=False)
    visn_att = attention_forward(p["visual_attention"], visn, lang, lang_mask,
                                 num_heads, self_attn=False)
    # self attention
    lang_att = attention_forward(p["lang_self_att"], lang_att, lang_att,
                                 lang_mask, num_heads, self_attn=True)
    visn_att = attention_forward(p["visn_self_att"], visn_att, visn_att,
                                 visn_mask, num_heads, self_attn=True)
    # FFN
    lang_out = ffn_forward(p["lang_ffn"], lang_att)
    visn_out = ffn_forward(p["visn_ffn"], visn_att)
    return lang_out, visn_out


def visual_feat_encoder_forward(p, feats, boxes):
    x = linear(feats, p["visn_w"], p["visn_b"])
    if boxes is None:
        return layernorm(x, p["visn_ln_g"], p["visn_ln_b"])
    y = linear(boxes, p["box_w"], p["box_b"])
    # dropout: identity (eval)
    return dual_layernorm_avg(x, y, p["visn_ln_g"], p["visn_ln_b"],
                              p["box_ln_g"], p["box_ln_b"])


def lxmert_encoder_forward(pparams, lang_feats, lang_mask, visn_feats,
                           visn_mask, num_heads):
    feats, boxes = visn_feats
    visn = visual_feat_encoder_forward(pparams["visn_fc"], feats, boxes)
    lang = lang_feats
    for p in pparams["layer"]:
        lang = bert_layer_forward(p, lang, lang_mask, num_heads)
    for p in pparams["r_layers"]:
        visn = bert_layer_forward(p, visn, visn_mask, num_heads)
    for p in pparams["x_layers"]:
        lang, visn = x_layer_forward(p, lang, lang_mask, visn, visn_mask, num_heads)
    return lang, visn


# ---------------------------------------------------------------------------
# Pure-JAX f32 reference (for correctness check)
# ---------------------------------------------------------------------------
def _ref_linear(x, p, act=None):
    y = jnp.dot(x, p["w"], precision=_P_HIGH) + p["b"]
    if act == "gelu":
        y = y * 0.5 * (1.0 + jax.lax.erf(y * _INV_SQRT2))
    return y


def _ref_layernorm(x, g, b, eps=_LN_EPS):
    m = jnp.mean(x, axis=-1, keepdims=True)
    v = jnp.mean((x - m) ** 2, axis=-1, keepdims=True)
    return (x - m) * jax.lax.rsqrt(v + eps) * g + b


def _ref_attention(p, hidden, ctx, mask, nh):
    B, Sq, H = hidden.shape
    Sk = ctx.shape[1]
    Dh = H // nh
    if mask is None:
        mask = jnp.zeros((B, Sk), dtype=jnp.float32)
    q = _ref_linear(hidden, p["q"]).reshape(B, Sq, nh, Dh).transpose(0, 2, 1, 3)
    k = _ref_linear(ctx, p["k"]).reshape(B, Sk, nh, Dh).transpose(0, 2, 1, 3)
    v = _ref_linear(ctx, p["v"]).reshape(B, Sk, nh, Dh).transpose(0, 2, 1, 3)
    s = jnp.einsum("bhqd,bhkd->bhqk", q, k, precision=_P_HIGH) / math.sqrt(Dh)
    s = s + mask[:, None, None, :]
    a = jax.nn.softmax(s, axis=-1)
    o = jnp.einsum("bhqk,bhkd->bhqd", a, v, precision=_P_HIGH)
    o = o.transpose(0, 2, 1, 3).reshape(B, Sq, H)
    proj = _ref_linear(o, p["out"])
    return _ref_layernorm(proj + hidden, p["out_ln"]["g"], p["out_ln"]["b"])


def _ref_ffn(p, x):
    inter = _ref_linear(x, p["inter"], act="gelu")
    out = _ref_linear(inter, p["out"])
    return _ref_layernorm(out + x, p["out_ln"]["g"], p["out_ln"]["b"])


def _ref_bert_layer(p, x, mask, nh):
    return _ref_ffn(p["ffn"], _ref_attention(p["att"], x, x, mask, nh))


def _ref_x_layer(p, lang, lang_mask, visn, visn_mask, nh):
    lang_att = _ref_attention(p["visual_attention"], lang, visn, visn_mask, nh)
    visn_att = _ref_attention(p["visual_attention"], visn, lang, lang_mask, nh)
    lang_att = _ref_attention(p["lang_self_att"], lang_att, lang_att, lang_mask, nh)
    visn_att = _ref_attention(p["visn_self_att"], visn_att, visn_att, visn_mask, nh)
    return _ref_ffn(p["lang_ffn"], lang_att), _ref_ffn(p["visn_ffn"], visn_att)


def _ref_visual_feat_encoder(p, feats, boxes):
    x = _ref_layernorm(_ref_linear(feats, p["visn_fc"]),
                       p["visn_ln"]["g"], p["visn_ln"]["b"])
    if boxes is None:
        return x
    y = _ref_layernorm(_ref_linear(boxes, p["box_fc"]),
                       p["box_ln"]["g"], p["box_ln"]["b"])
    return (x + y) / 2.0


def _ref_encoder(params, lang_feats, lang_mask, visn_feats, visn_mask, nh):
    feats, boxes = visn_feats
    visn = _ref_visual_feat_encoder(params["visn_fc"], feats, boxes)
    lang = lang_feats
    for p in params["layer"]:
        lang = _ref_bert_layer(p, lang, lang_mask, nh)
    for p in params["r_layers"]:
        visn = _ref_bert_layer(p, visn, visn_mask, nh)
    for p in params["x_layers"]:
        lang, visn = _ref_x_layer(p, lang, lang_mask, visn, visn_mask, nh)
    return lang, visn


# ---------------------------------------------------------------------------
# Demo / self-test
# ---------------------------------------------------------------------------
if __name__ == "__main__":
    cfg = dict(
        hidden_size=32,
        num_attention_heads=4,
        intermediate_size=64,
        visual_feat_dim=16,
        visual_pos_dim=4,
        l_layers=2,
        x_layers=1,
        r_layers=1,
    )
    B, S_L, S_V = 2, 8, 8

    key = jax.random.PRNGKey(0)
    kp, kl, kf, kb = jax.random.split(key, 4)
    params = init_encoder(kp, cfg)
    pparams = prepare_pallas_params(params)

    lang_feats = jax.random.normal(kl, (B, S_L, cfg["hidden_size"]), jnp.float32)
    visn_roi_feats = jax.random.normal(kf, (B, S_V, cfg["visual_feat_dim"]), jnp.float32)
    visn_boxes = jax.random.uniform(kb, (B, S_V, cfg["visual_pos_dim"]), jnp.float32)

    # additive attention masks (0 = attend, -10000 = masked), like HF extended masks
    lang_keep = jnp.concatenate(
        [jnp.ones((B, S_L - 2), jnp.float32), jnp.array([[1.0, 1.0], [0.0, 0.0]])],
        axis=-1,
    )
    lang_mask = (1.0 - lang_keep) * -10000.0
    visn_mask = None  # visn_attention_mask=None in the reference module

    lang_out, visn_out = lxmert_encoder_forward(
        pparams, lang_feats, lang_mask, (visn_roi_feats, visn_boxes),
        visn_mask, cfg["num_attention_heads"],
    )
    jax.block_until_ready((lang_out, visn_out))

    lang_ref, visn_ref = _ref_encoder(
        params, lang_feats, lang_mask, (visn_roi_feats, visn_boxes),
        visn_mask, cfg["num_attention_heads"],
    )

    assert lang_out.shape == (B, S_L, cfg["hidden_size"])
    assert visn_out.shape == (B, S_V, cfg["hidden_size"])
    # bf16 matmuls + approx reciprocal -> slightly looser tolerance than pure f32
    assert jnp.allclose(lang_out, lang_ref, atol=5e-2, rtol=5e-2), "lang mismatch"
    assert jnp.allclose(visn_out, visn_ref, atol=5e-2, rtol=5e-2), "visn mismatch"

    print("KERNEL_OK")
</pallas_src>

<mosaic_0001>
module attributes {stable_mosaic.version = 11 : i64} {
  func.func @_linear_kernel(%arg0: i32, %arg1: i32, %arg2: i32, %arg3: memref<16x16xf32, #tpu.memory_space<vmem>>, %arg4: memref<16x32xbf16, #tpu.memory_space<vmem>>, %arg5: memref<1x32xf32, #tpu.memory_space<vmem>>, %arg6: memref<16x32xf32, #tpu.memory_space<vmem>>, %arg7: memref<16x32xf32, #tpu.memory_space<vmem>>) attributes {dimension_semantics = [#tpu.dimension_semantics<parallel>, #tpu.dimension_semantics<parallel>, #tpu.dimension_semantics<arbitrary>], iteration_bounds = array<i64: 1, 1, 1>, scalar_prefetch = 0 : i64, scratch_operands = 1 : i64, tpu.core_type = #tpu.core_type<tc>, window_params = [{transform_indices = @transform_0, window_bounds = array<i64: 16, 16>}, {transform_indices = @transform_1, window_bounds = array<i64: 16, 32>}, {transform_indices = @transform_2, window_bounds = array<i64: 1, 32>}, {transform_indices = @transform_3, window_bounds = array<i64: 16, 32>}]} {
    %c0_i32 = arith.constant 0 : i32
    %0 = arith.cmpi eq, %arg2, %c0_i32 : i32
    %1 = arith.extui %0 : i1 to i32
    %c0_i32_0 = arith.constant 0 : i32
    %2 = arith.cmpi ne, %1, %c0_i32_0 : i32
    scf.if %2 {
      %cst_10 = arith.constant 0.000000e+00 : f32
      %13 = vector.broadcast %cst_10 : f32 to vector<16x32xf32>
      %c0_11 = arith.constant 0 : index
      %c0_12 = arith.constant 0 : index
      %14 = vector.load %arg7[%c0_11, %c0_12] : memref<16x32xf32, #tpu.memory_space<vmem>>, vector<16x32xf32>
      tpu.vector_store %arg7[%c0_11, %c0_12], %13 {strides = array<i32>} : memref<16x32xf32, #tpu.memory_space<vmem>>, vector<16x32xf32>,
    } else {
    }
    %c0 = arith.constant 0 : index
    %c0_1 = arith.constant 0 : index
    %3 = vector.load %arg7[%c0, %c0_1] : memref<16x32xf32, #tpu.memory_space<vmem>>, vector<16x32xf32>
    %c0_2 = arith.constant 0 : index
    %c0_3 = arith.constant 0 : index
    %4 = vector.load %arg3[%c0_2, %c0_3] : memref<16x16xf32, #tpu.memory_space<vmem>>, vector<16x16xf32>
    %5 = arith.truncf %4 : vector<16x16xf32> to vector<16x16xbf16>
    %c0_4 = arith.constant 0 : index
    %c0_5 = arith.constant 0 : index
    %6 = vector.load %arg4[%c0_4, %c0_5] : memref<16x32xbf16, #tpu.memory_space<vmem>>, vector<16x32xbf16>
    %cst = arith.constant dense<0.000000e+00> : vector<16x32xf32>
    %7 = tpu.matmul %5, %6, %cst {dimension_numbers = #tpu.dot_dimension_numbers<[1], [0], [0], [1], [0, 0, 1, 1], [], []>} : vector<16x16xbf16>, vector<16x32xbf16>, vector<16x32xf32> -> vector<16x32xf32>
    %8 = arith.addf %3, %7 : vector<16x32xf32>
    %c0_6 = arith.constant 0 : index
    %c0_7 = arith.constant 0 : index
    %9 = vector.load %arg7[%c0_6, %c0_7] : memref<16x32xf32, #tpu.memory_space<vmem>>, vector<16x32xf32>
    tpu.vector_store %arg7[%c0_6, %c0_7], %8 {strides = array<i32>} : memref<16x32xf32, #tpu.memory_space<vmem>>, vector<16x32xf32>,
    %c0_i32_8 = arith.constant 0 : i32
    %10 = arith.cmpi eq, %arg2, %c0_i32_8 : i32
    %11 = arith.extui %10 : i1 to i32
    %c0_i32_9 = arith.constant 0 : i32
    %12 = arith.cmpi ne, %11, %c0_i32_9 : i32
    scf.if %12 {
      %c0_10 = arith.constant 0 : index
      %c0_11 = arith.constant 0 : index
      %13 = vector.load %arg7[%c0_10, %c0_11] : memref<16x32xf32, #tpu.memory_space<vmem>>, vector<16x32xf32>
      %c0_12 = arith.constant 0 : index
      %c0_13 = arith.constant 0 : index
      %14 = vector.load %arg5[%c0_12, %c0_13] : memref<1x32xf32, #tpu.memory_space<vmem>>, vector<1x32xf32>
      %15 = vector.broadcast %14 : vector<1x32xf32> to vector<16x32xf32>
      %16 = arith.addf %13, %15 : vector<16x32xf32>
      %c0_14 = arith.constant 0 : index
      %c0_15 = arith.constant 0 : index
      %17 = vector.load %arg6[%c0_14, %c0_15] : memref<16x32xf32, #tpu.memory_space<vmem>>, vector<16x32xf32>
      tpu.vector_store %arg6[%c0_14, %c0_15], %16 {strides = array<i32>} : memref<16x32xf32, #tpu.memory_space<vmem>>, vector<16x32xf32>,
    } else {
    }
    return
  }
  func.func @transform_0(%arg0: i32, %arg1: i32, %arg2: i32) -> (i32, i32) {
    %c0_i32 = arith.constant 0 : i32
    return %arg0, %arg2 : i32, i32
  }
  func.func @transform_1(%arg0: i32, %arg1: i32, %arg2: i32) -> (i32, i32) {
    %c0_i32 = arith.constant 0 : i32
    return %arg2, %arg1 : i32, i32
  }
  func.func @transform_2(%arg0: i32, %arg1: i32, %arg2: i32) -> (i32, i32) {
    %c0_i32 = arith.constant 0 : i32
    %c0_i32_0 = arith.constant 0 : i32
    return %c0_i32, %arg1 : i32, i32
  }
  func.func @transform_3(%arg0: i32, %arg1: i32, %arg2: i32) -> (i32, i32) {
    %c0_i32 = arith.constant 0 : i32
    return %arg0, %arg1 : i32, i32
  }
}

</mosaic_0001>

<llo_original>
// kernel: tpu_custom_call.1
$region0: #{tpu_custom_call.1}
  #allocation0 [shape = 'u32[]', space=smem, size = 0x4, offset = 0x4, fixed_abs, tag = 'smem constant byte address 0x4 - core index']
  #allocation1 [shape = 'u32[144,128]{1,0:T(1,128)}', space=vmem, size = 0x12000, scoped, tag = 'internal scratch']
  #allocation2 [shape = 'f32[16,32]{1,0:T(8,128)}', space=vmem, size = 0x2000, scoped, tag = 'scratch operand']
  %s0 = inlined_call_operand.hbm [shape: f32[16,16], index: 0, kind: input, shape index: {}]
  %s1 = inlined_call_operand.hbm [shape: bf16[16,32], index: 1, kind: input, shape index: {}]
  %s2 = inlined_call_operand.vmem [shape: f32[1,32], index: 2, kind: input, shape index: {}]
  %s3 = inlined_call_operand.hbm [shape: f32[16,32], index: 3, kind: output, shape index: {}]
  %s4 = sld [smem:[#allocation0]]
  $region38: #{tpu_custom_call.1} parent=0
    _
  %s6 = ssub.s32 1, %s4
  %s7 = scalar_select 0, %s6, %s4
  $region1: #{tpu_custom_call.1} parent=0
    #allocation3 [shape = 'u8[8192]{0}', space=vmem, size = 0x2000, scoped, tag = 'input window, operand 0, single buffered']
    #allocation4 [shape = 's32[1]{0}', space=sflag, size = 0x4, scoped, tag = 'scoped memory for tpu_custom_call.1']
    #allocation5 [shape = 's32[1]{0}', space=sflag, size = 0x4, scoped, tag = 'scoped memory for tpu_custom_call.1']
    #allocation6 [shape = 'u8[4096]{0}', space=vmem, size = 0x1000, scoped, tag = 'input window, operand 1, single buffered']
    #allocation7 [shape = 's32[1]{0}', space=sflag, size = 0x4, scoped, tag = 'scoped memory for tpu_custom_call.1']
    #allocation8 [shape = 'u8[8192]{0}', space=vmem, size = 0x2000, scoped, tag = 'output window, operand 0, single buffered']
    %8 = vsyncpa [#allocation4], 0
    %9 = vsyncpa [#allocation7], 0
    %10 = vsyncpa [#allocation5], 0
    // Predicated region
    $region2: #{tpu_custom_call.1} parent=1 // pred_check
      _
    $region3: #{tpu_custom_call.1} parent=1 // pred_check_branch
      %12 = sbr.rel (0) target = $region5
    $region4: #{tpu_custom_call.1} parent=1 // pred_region
      %s14 = ssub.s32 256, 256
      %15 = vsyncadd [#allocation4], %s14
      %s16 = sshll.u32 [#allocation3], 4
      %s17 = int_to_ptr.vmem [resolvable:$true] %s16
      %22 = dma.hbm_to_vmem [thread:$0]  %s0, 256, %s17, [#allocation4], 128, 128, 8
    $region5: #{tpu_custom_call.1} parent=1 // pred_fallthru
      _
    // Predicated region
    $region6: #{tpu_custom_call.1} parent=1 // pred_check
      _
    $region7: #{tpu_custom_call.1} parent=1 // pred_check_branch
      %24 = sbr.rel (0) target = $region9
    $region8: #{tpu_custom_call.1} parent=1 // pred_region
      %s26 = ssub.s32 128, 128
      %27 = vsyncadd [#allocation7], %s26
      %s28 = sshll.u32 [#allocation6], 4
      %s29 = int_to_ptr.vmem [resolvable:$true] %s28
      %34 = dma.hbm_to_vmem [thread:$0]  %s1, 128, %s29, [#allocation7], 64, 64, 4
    $region9: #{tpu_custom_call.1} parent=1 // pred_fallthru
      _
    // Predicated region
    $region10: #{tpu_custom_call.1} parent=1 // pred_check
      _
    $region11: #{tpu_custom_call.1} parent=1 // pred_check_branch
      %36 = sbr.rel (0) target = $region13
    $region12: #{tpu_custom_call.1} parent=1 // pred_region
      _
    $region13: #{tpu_custom_call.1} parent=1 // pred_fallthru
      _
    // Predicated region
    $region14: #{tpu_custom_call.1} parent=1 // pred_check
      _
    $region15: #{tpu_custom_call.1} parent=1 // pred_check_branch
      %38 = sbr.rel (0) target = $region17
    $region16: #{tpu_custom_call.1} parent=1 // pred_region
      %39 = dma.done [#allocation4], 256
    $region17: #{tpu_custom_call.1} parent=1 // pred_fallthru
      _
    // Predicated region
    $region18: #{tpu_custom_call.1} parent=1 // pred_check
      _
    $region19: #{tpu_custom_call.1} parent=1 // pred_check_branch
      %41 = sbr.rel (0) target = $region21
    $region20: #{tpu_custom_call.1} parent=1 // pred_region
      %42 = dma.done [#allocation7], 128
    $region21: #{tpu_custom_call.1} parent=1 // pred_fallthru
      _
    %p44 = scmp.eq.s32.totalorder 0, 0
    // Predicated region
    $region22: #{tpu_custom_call.1} parent=1 // pred_check
      %p45 = pneg %p44
    $region23: #{tpu_custom_call.1} parent=1 // pred_check_branch
      %47 = sbr.rel (%p45) target = $region25
    $region24: #{tpu_custom_call.1} parent=1 // pred_region
      %vm48 = vcmask 261120
      %49 = vst.msk [vmem:[#allocation2] sm:$0xff] %vm48, 0.0
      %50 = vst.msk [vmem:[#allocation2 + $0x8] sm:$0xff] %vm48, 0.0
    $region25: #{tpu_custom_call.1} parent=1 // pred_fallthru
      _
    %v51 = vld [vmem:[#allocation2] sm:$0xff]
    %v52 = vld [vmem:[#allocation2 + $0x8] sm:$0xff]
    %v53 = vld [vmem:[#allocation3] sm:$0xff]
    %v54 = vld [vmem:[#allocation3 + $0x8] sm:$0xff]
    %v55 = vpack.c.bf16 %v54, %v53
    %v56 = vld [vmem:[#allocation6] sm:$0xf]
    %v57 = vld [vmem:[#allocation6 + $0x4] sm:$0xf]
    %v60 = vunpack.c.l.b16 %v56
    %v61 = vunpack.c.l.b16 %v57
    %v62 = vpack.c.b16 %v61, %v60
    %vm64 = vcmask 130048
    %v66 = vsel %vm64, %v55, 0
    %68 = vmatprep.subr.bf16.mxu0 0
    %69 = vmatpush1.bf16.msra.mxu0 0
    %70 = vmatprep.subr.bf16.mxu0 0
    %71 = vmatpush1.bf16.msra.mxu0 0
    %72 = vmatprep.subr.bf16.mxu0 0
    %73 = vmatpush1.bf16.msra.mxu0 0
    %74 = vmatprep.subr.bf16.mxu0 0
    %75 = vmatpush1.bf16.msra.mxu0 0
    %76 = vmatprep.subr.bf16.mxu0 0
    %77 = vmatpush1.bf16.msra.mxu0 0
    %78 = vmatprep.subr.bf16.mxu0 0
    %79 = vmatpush1.bf16.msra.mxu0 0
    %80 = vmatprep.subr.bf16.mxu0 0
    %81 = vmatpush1.bf16.msra.mxu0 0
    %82 = vmatprep.subr.bf16.mxu0 0
    %83 = vmatpush1.bf16.msra.mxu0 %v62
    %84 = vmatprep.subr.bf16.mxu0 0
    %85 = vmatpush2.bf16.msra.mxu0 0
    %86 = vmatprep.subr.bf16.mxu0 0
    %87 = vmatpush2.bf16.msra.mxu0 0
    %88 = vmatprep.subr.bf16.mxu0 0
    %89 = vmatpush2.bf16.msra.mxu0 0
    %90 = vmatprep.subr.bf16.mxu0 0
    %91 = vmatpush2.bf16.msra.mxu0 0
    %92 = vmatprep.subr.bf16.mxu0 0
    %93 = vmatpush2.bf16.msra.mxu0 0
    %94 = vmatprep.subr.bf16.mxu0 0
    %95 = vmatpush2.bf16.msra.mxu0 0
    %96 = vmatprep.subr.bf16.mxu0 0
    %97 = vmatpush2.bf16.msra.mxu0 0
    %98 = vmatprep.subr.bf16.mxu0 0
    %99 = vmatpush2.bf16.msra.mxu0 0
    %100 = vmatprep.mubr.bf16.mxu0 0
    %101 = vmatmul.mubr.bf16.gmra.mxu0 %v66
    %v102 = vpop.f32.mrf.mxu0
    %v103 = vadd.f32 0.0, %v102
    %v104 = vpop.f32.mrf.mxu0
    %v105 = vpop.f32.mrf.mxu0
    %v106 = vadd.f32 0.0, %v105
    %v107 = vpop.f32.mrf.mxu0
    %108 = vdwg.mxu0
    %v109 = vadd.f32 %v51, %v103
    %v110 = vadd.f32 %v52, %v106
    %vm111 = vcmask 261120
    %112 = vst.msk [vmem:[#allocation2] sm:$0xff] %vm111, %v109
    %113 = vst.msk [vmem:[#allocation2 + $0x8] sm:$0xff] %vm111, %v110
    // Predicated region
    $region26: #{tpu_custom_call.1} parent=1 // pred_check
      %p114 = pneg %p44
    $region27: #{tpu_custom_call.1} parent=1 // pred_check_branch
      %116 = sbr.rel (%p114) target = $region29
    $region28: #{tpu_custom_call.1} parent=1 // pred_region
      %v117 = vld [vmem:[#allocation2] sm:$0xff]
      %v118 = vld [vmem:[#allocation2 + $0x8] sm:$0xff]
      %v119 = vld [vmem:[%s2] sm:$0x1]
      %v121 = vlaneseq
      %v122 = vshrl.u32 %v121, 7
      %v123 = vsub.s32 0, %v122
      %v124 = vrot.slane %v119, %v123
      %v126 = vadd.f32 %v117, %v124
      %v127 = vadd.f32 %v118, %v124
      %128 = vst.msk [vmem:[#allocation8] sm:$0xff] %vm111, %v126
      %129 = vst.msk [vmem:[#allocation8 + $0x8] sm:$0xff] %vm111, %v127
    $region29: #{tpu_custom_call.1} parent=1 // pred_fallthru
      _
    // Predicated region
    $region30: #{tpu_custom_call.1} parent=1 // pred_check
      _
    $region31: #{tpu_custom_call.1} parent=1 // pred_check_branch
      %131 = sbr.rel (0) target = $region33
    $region32: #{tpu_custom_call.1} parent=1 // pred_region
      %s133 = ssub.s32 256, 256
      %134 = vsyncadd [#allocation5], %s133
      %s135 = sshll.u32 [#allocation8], 4
      %s136 = int_to_ptr.vmem [resolvable:$true] %s135
      %141 = dma.vmem_to_hbm [thread:$0]  %s136, 256, %s3, [#allocation5], 128, 128, 8
    $region33: #{tpu_custom_call.1} parent=1 // pred_fallthru
      _
    // Predicated region
    $region34: #{tpu_custom_call.1} parent=1 // pred_check
      _
    $region35: #{tpu_custom_call.1} parent=1 // pred_check_branch
      %143 = sbr.rel (0) target = $region37
    $region36: #{tpu_custom_call.1} parent=1 // pred_region
      %144 = dma.done [#allocation5], 256
    $region37: #{tpu_custom_call.1} parent=1 // pred_fallthru
      _
    %145 = vsyncpa [#allocation4], 1
    %146 = vsyncpa [#allocation7], 1
    %147 = vsyncpa [#allocation5], 1

</llo_original>
